<compile_context>
chip_gen: v5e
topology: v5e:2x2
jax: 0.10.0
libtpu: 0.0.40
codegen_flags: <defaults>
</compile_context>

<pallas_src>
import jax
import jax.numpy as jnp
from jax.experimental import pallas as pl
from jax.experimental.pallas import tpu as pltpu

_EPS = 1e-12


# ---------------- Pallas kernel (hot path) ------------------------------------

def _tv_partial_sums_kernel(p_ref, m_ref, ysum_ref, xsum_ref):
    # p_ref: (1, TC, H, W) pred channel tile; m_ref: (1, 1, H, W) mask tile.
    p = p_ref[...].astype(jnp.float32)
    m = m_ref[...].astype(jnp.float32)

    # vertical (H-direction) masked |forward diff|, mask broadcast across C
    y_d = jnp.abs(p[:, :, 1:, :] - p[:, :, :-1, :]) * m[:, :, :-1, :]
    # horizontal (W-direction) masked |forward diff|
    x_d = jnp.abs(p[:, :, :, 1:] - p[:, :, :, :-1]) * m[:, :, :, :-1]

    ysum_ref[...] = jnp.sum(y_d).reshape(ysum_ref.shape)
    xsum_ref[...] = jnp.sum(x_d).reshape(xsum_ref.shape)


# ---------------- pallas_call wrapper ------------------------------------------

def _pick_channel_tile(c, h, w, itemsize, budget_bytes=4 << 20):
    """Largest divisor of C whose (TC, H, W) block fits the VMEM byte budget."""
    best = 1
    for tc in range(1, c + 1):
        if c % tc == 0 and tc * h * w * itemsize <= budget_bytes:
            best = tc
    return best


def _tv_numerator_sums(pred, mask_f32):
    """Total masked |diff| sums over the whole batch: (y_sum, x_sum)."""
    n, c, h, w = pred.shape
    tc = _pick_channel_tile(c, h, w, pred.dtype.itemsize)
    n_ct = c // tc
    grid = (n, n_ct)

    pred_spec = pl.BlockSpec((1, tc, h, w), lambda i, j: (i, j, 0, 0))
    # mask index_map ignores the channel-tile index -> fetched once per sample.
    mask_spec = pl.BlockSpec((1, 1, h, w), lambda i, j: (i, 0, 0, 0))
    out_spec = pl.BlockSpec((1, 1, 1), lambda i, j: (i * n_ct + j, 0, 0))
    out_shape = jax.ShapeDtypeStruct((n * n_ct, 1, 1), jnp.float32)

    # VMEM: double-buffered pred + mask blocks (+ headroom); keep well under the
    # 64 MiB physical VMEM of a v7x TensorCore.
    pred_block_bytes = tc * h * w * pred.dtype.itemsize
    mask_block_bytes = h * w * mask_f32.dtype.itemsize
    need = 2 * (pred_block_bytes + mask_block_bytes) + (1 << 16)
    vmem_limit = int(min(max(2 * need, 32 * 2**20), 100 * 2**20))
    # TODO(synk): for very large single-channel images (H*W block > ~16 MiB) add
    # halo-tiled spatial blocking instead of full-(H,W) blocks.

    ysum, xsum = pl.pallas_call(
        _tv_partial_sums_kernel,
        grid=grid,
        in_specs=[pred_spec, mask_spec],
        out_specs=(out_spec, out_spec),
        out_shape=(out_shape, out_shape),
        compiler_params=pltpu.CompilerParams(
            dimension_semantics=("parallel", "parallel"),
            vmem_limit_bytes=vmem_limit,
        ),
    )(pred, mask_f32)
    return jnp.sum(ysum), jnp.sum(xsum)


# ---------------- forward semantics --------------------------------------------

def masked_tv_loss_pallas(pred, mask=None, loss_weight=1.0):
    n, c, h, w = pred.shape

    if mask is None:
        # weight=None in the underlying L1Loss -> plain mean over all elements.
        ones = jnp.ones((n, 1, h, w), jnp.float32)
        y_sum, x_sum = _tv_numerator_sums(pred, ones)
        y_den = jnp.float32(n * c * (h - 1) * w)
        x_den = jnp.float32(n * c * h * (w - 1))
        return loss_weight * (x_sum / x_den + y_sum / y_den)

    assert mask.shape == (n, 1, h, w), mask.shape
    mask_f = mask.astype(jnp.float32)
    y_sum, x_sum = _tv_numerator_sums(pred, mask_f)
    # masked-mean denominators computed on the tiny un-broadcast mask; factor C
    # because the reference expands the (N,1,...) weight to (N,C,...) before sum.
    y_den = c * jnp.sum(mask_f[:, :, :-1, :]) + _EPS
    x_den = c * jnp.sum(mask_f[:, :, :, :-1]) + _EPS
    return loss_weight * (x_sum / x_den + y_sum / y_den)


class MaskedTVLoss:
    """Masked total-variation loss — Pallas TPU implementation.

    Matches mmweather MaskedTVLoss(L1Loss): pixel-wise masked mean of the
    |forward-difference| along H and W (reduction='mean', sample_wise=False).
    """

    def __init__(self, loss_weight=1.0):
        self.loss_weight = loss_weight

    def __call__(self, pred, mask=None):
        return masked_tv_loss_pallas(pred, mask, loss_weight=self.loss_weight)


# ---------------- demo / self-check ---------------------------------------------

if __name__ == "__main__":
    key = jax.random.PRNGKey(0)
    k1, k2 = jax.random.split(key, 2)
    N, C, H, W = 2, 4, 16, 16
    pred = jax.random.normal(k1, (N, C, H, W), dtype=jnp.float32)
    mask = (jax.random.uniform(k2, (N, 1, H, W)) > 0.5).astype(jnp.float32)

    loss_fn = MaskedTVLoss(loss_weight=2.0)
    out = jax.block_until_ready(loss_fn(pred, mask))

    # pure-JAX reference mirroring L1Loss / mask_reduce_loss semantics
    def ref_masked_tv(pred, mask, lw):
        eps = 1e-12
        y = jnp.abs(pred[:, :, :-1, :] - pred[:, :, 1:, :]) * mask[:, :, :-1, :]
        x = jnp.abs(pred[:, :, :, :-1] - pred[:, :, :, 1:]) * mask[:, :, :, :-1]
        wy = jnp.broadcast_to(mask[:, :, :-1, :], y.shape)
        wx = jnp.broadcast_to(mask[:, :, :, :-1], x.shape)
        y_term = lw * (jnp.sum(y) / (jnp.sum(wy) + eps))
        x_term = lw * (jnp.sum(x) / (jnp.sum(wx) + eps))
        return x_term + y_term

    ref = ref_masked_tv(pred, mask, 2.0)
    assert out.shape == (), out.shape
    assert jnp.allclose(out, ref, rtol=1e-5, atol=1e-6), (out, ref)

    # unmasked path (mask=None -> plain mean of |diff| along each direction)
    out_none = jax.block_until_ready(MaskedTVLoss()(pred, None))
    ref_none = (jnp.mean(jnp.abs(pred[:, :, :-1, :] - pred[:, :, 1:, :]))
                + jnp.mean(jnp.abs(pred[:, :, :, :-1] - pred[:, :, :, 1:])))
    assert jnp.allclose(out_none, ref_none, rtol=1e-5, atol=1e-6), (out_none, ref_none)

    print("KERNEL_OK")
</pallas_src>

<mosaic_0001>
module attributes {stable_mosaic.version = 11 : i64} {
  func.func @_tv_partial_sums_kernel(%arg0: i32, %arg1: i32, %arg2: memref<1x4x16x16xf32, #tpu.memory_space<vmem>>, %arg3: memref<1x1x16x16xf32, #tpu.memory_space<vmem>>, %arg4: memref<1x1x1xf32, #tpu.memory_space<vmem>>, %arg5: memref<1x1x1xf32, #tpu.memory_space<vmem>>) attributes {dimension_semantics = [#tpu.dimension_semantics<parallel>, #tpu.dimension_semantics<parallel>], iteration_bounds = array<i64: 2, 1>, scalar_prefetch = 0 : i64, scratch_operands = 0 : i64, tpu.core_type = #tpu.core_type<tc>, window_params = [{transform_indices = @transform_0, window_bounds = array<i64: 1, 4, 16, 16>}, {transform_indices = @transform_1, window_bounds = array<i64: 1, 1, 16, 16>}, {transform_indices = @transform_2, window_bounds = array<i64: 1, 1, 1>}, {transform_indices = @transform_3, window_bounds = array<i64: 1, 1, 1>}]} {
    %c0 = arith.constant 0 : index
    %c0_0 = arith.constant 0 : index
    %c0_1 = arith.constant 0 : index
    %c0_2 = arith.constant 0 : index
    %0 = vector.load %arg2[%c0, %c0_0, %c0_1, %c0_2] : memref<1x4x16x16xf32, #tpu.memory_space<vmem>>, vector<1x4x16x16xf32>
    %c0_3 = arith.constant 0 : index
    %c0_4 = arith.constant 0 : index
    %c0_5 = arith.constant 0 : index
    %c0_6 = arith.constant 0 : index
    %1 = vector.load %arg3[%c0_3, %c0_4, %c0_5, %c0_6] : memref<1x1x16x16xf32, #tpu.memory_space<vmem>>, vector<1x1x16x16xf32>
    %2 = vector.extract_strided_slice %0 {offsets = [0, 0, 1, 0], sizes = [1, 4, 15, 16], strides = [1, 1, 1, 1]} : vector<1x4x16x16xf32> to vector<1x4x15x16xf32>
    %3 = vector.extract_strided_slice %0 {offsets = [0, 0, 0, 0], sizes = [1, 4, 15, 16], strides = [1, 1, 1, 1]} : vector<1x4x16x16xf32> to vector<1x4x15x16xf32>
    %4 = arith.subf %2, %3 : vector<1x4x15x16xf32>
    %5 = math.absf %4 : vector<1x4x15x16xf32>
    %6 = vector.extract_strided_slice %1 {offsets = [0, 0, 0, 0], sizes = [1, 1, 15, 16], strides = [1, 1, 1, 1]} : vector<1x1x16x16xf32> to vector<1x1x15x16xf32>
    %7 = vector.broadcast %6 : vector<1x1x15x16xf32> to vector<1x4x15x16xf32>
    %8 = arith.mulf %5, %7 : vector<1x4x15x16xf32>
    %9 = vector.extract_strided_slice %0 {offsets = [0, 0, 0, 1], sizes = [1, 4, 16, 15], strides = [1, 1, 1, 1]} : vector<1x4x16x16xf32> to vector<1x4x16x15xf32>
    %10 = vector.extract_strided_slice %0 {offsets = [0, 0, 0, 0], sizes = [1, 4, 16, 15], strides = [1, 1, 1, 1]} : vector<1x4x16x16xf32> to vector<1x4x16x15xf32>
    %11 = arith.subf %9, %10 : vector<1x4x16x15xf32>
    %12 = math.absf %11 : vector<1x4x16x15xf32>
    %13 = vector.extract_strided_slice %1 {offsets = [0, 0, 0, 0], sizes = [1, 1, 16, 15], strides = [1, 1, 1, 1]} : vector<1x1x16x16xf32> to vector<1x1x16x15xf32>
    %14 = vector.broadcast %13 : vector<1x1x16x15xf32> to vector<1x4x16x15xf32>
    %15 = arith.mulf %12, %14 : vector<1x4x16x15xf32>
    %16 = vector.shape_cast %8 : vector<1x4x15x16xf32> to vector<1x1x4x15x16xf32>
    %cst = arith.constant dense<0.000000e+00> : vector<1xf32>
    %17 = vector.multi_reduction <add>, %16, %cst [1, 2, 3, 4] : vector<1x1x4x15x16xf32> to vector<1xf32>
    %18 = vector.shape_cast %17 : vector<1xf32> to vector<1x1x1x1x1xf32>
    %19 = vector.extract %18[0, 0, 0, 0, 0] : f32 from vector<1x1x1x1x1xf32>
    %20 = vector.broadcast %19 : f32 to vector<1x1x1xf32>
    %c0_7 = arith.constant 0 : index
    %c0_8 = arith.constant 0 : index
    %c0_9 = arith.constant 0 : index
    %21 = vector.load %arg4[%c0_7, %c0_8, %c0_9] : memref<1x1x1xf32, #tpu.memory_space<vmem>>, vector<1x1x1xf32>
    tpu.vector_store %arg4[%c0_7, %c0_8, %c0_9], %20 {strides = array<i32>} : memref<1x1x1xf32, #tpu.memory_space<vmem>>, vector<1x1x1xf32>,
    %22 = vector.shape_cast %15 : vector<1x4x16x15xf32> to vector<1x1x4x16x15xf32>
    %cst_10 = arith.constant dense<0.000000e+00> : vector<1xf32>
    %23 = vector.multi_reduction <add>, %22, %cst_10 [1, 2, 3, 4] : vector<1x1x4x16x15xf32> to vector<1xf32>
    %24 = vector.shape_cast %23 : vector<1xf32> to vector<1x1x1x1x1xf32>
    %25 = vector.extract %24[0, 0, 0, 0, 0] : f32 from vector<1x1x1x1x1xf32>
    %26 = vector.broadcast %25 : f32 to vector<1x1x1xf32>
    %c0_11 = arith.constant 0 : index
    %c0_12 = arith.constant 0 : index
    %c0_13 = arith.constant 0 : index
    %27 = vector.load %arg5[%c0_11, %c0_12, %c0_13] : memref<1x1x1xf32, #tpu.memory_space<vmem>>, vector<1x1x1xf32>
    tpu.vector_store %arg5[%c0_11, %c0_12, %c0_13], %26 {strides = array<i32>} : memref<1x1x1xf32, #tpu.memory_space<vmem>>, vector<1x1x1xf32>,
    return
  }
  func.func @transform_0(%arg0: i32, %arg1: i32) -> (i32, i32, i32, i32) {
    %c0_i32 = arith.constant 0 : i32
    %c0_i32_0 = arith.constant 0 : i32
    %c0_i32_1 = arith.constant 0 : i32
    return %arg0, %arg1, %c0_i32, %c0_i32_0 : i32, i32, i32, i32
  }
  func.func @transform_1(%arg0: i32, %arg1: i32) -> (i32, i32, i32, i32) {
    %c0_i32 = arith.constant 0 : i32
    %c0_i32_0 = arith.constant 0 : i32
    %c0_i32_1 = arith.constant 0 : i32
    %c0_i32_2 = arith.constant 0 : i32
    return %arg0, %c0_i32, %c0_i32_0, %c0_i32_1 : i32, i32, i32, i32
  }
  func.func @transform_2(%arg0: i32, %arg1: i32) -> (i32, i32, i32) {
    %c1_i32 = arith.constant 1 : i32
    %0 = arith.muli %arg0, %c1_i32 : i32
    %1 = arith.addi %0, %arg1 : i32
    %c0_i32 = arith.constant 0 : i32
    %c0_i32_0 = arith.constant 0 : i32
    %c0_i32_1 = arith.constant 0 : i32
    return %1, %c0_i32, %c0_i32_0 : i32, i32, i32
  }
  func.func @transform_3(%arg0: i32, %arg1: i32) -> (i32, i32, i32) {
    %c1_i32 = arith.constant 1 : i32
    %0 = arith.muli %arg0, %c1_i32 : i32
    %1 = arith.addi %0, %arg1 : i32
    %c0_i32 = arith.constant 0 : i32
    %c0_i32_0 = arith.constant 0 : i32
    %c0_i32_1 = arith.constant 0 : i32
    return %1, %c0_i32, %c0_i32_0 : i32, i32, i32
  }
}

</mosaic_0001>

<llo_original>
// kernel: tpu_custom_call.1
$region0: #{tpu_custom_call.1}
  #allocation0 [shape = 'u32[]', space=smem, size = 0x4, offset = 0x4, fixed_abs, tag = 'smem constant byte address 0x4 - core index']
  #allocation1 [shape = 'u32[72,128]{1,0:T(1,128)}', space=vmem, size = 0x9000, scoped, tag = 'internal scratch']
  %s0 = inlined_call_operand.hbm [shape: f32[2,4,16,16], index: 0, kind: input, shape index: {}]
  %s1 = inlined_call_operand.hbm [shape: f32[2,1,16,16], index: 1, kind: input, shape index: {}]
  %s2 = inlined_call_operand.vmem [shape: f32[2,1,1], index: 2, kind: output, shape index: {0}]
  %s3 = inlined_call_operand.vmem [shape: f32[2,1,1], index: 3, kind: output, shape index: {1}]
  %4 = xla_tuple %s2, %s3
  %s5 = sld [smem:[#allocation0]]
  $region57: #{tpu_custom_call.1} parent=0
    _
  %s7 = ssub.s32 1, %s5
  %s8 = scalar_select 0, %s7, %s5
  $region1: #{tpu_custom_call.1} parent=0
    #allocation2 [shape = 'u8[65536]{0}', space=vmem, size = 0x10000, scoped, tag = 'input window, operand 0']
    #allocation3 [shape = 's32[2]{0}', space=sflag, size = 0x8, scoped, tag = 'scoped memory for tpu_custom_call.1']
    #allocation4 [shape = 'u8[16384]{0}', space=vmem, size = 0x4000, scoped, tag = 'input window, operand 1']
    #allocation5 [shape = 's32[2]{0}', space=sflag, size = 0x8, scoped, tag = 'scoped memory for tpu_custom_call.1']
    %9 = vsyncpa [#allocation3], 0
    %s10 = scalar_lea.sflag [#allocation3], 1
    %11 = vsyncpa %s10, 0
    %12 = vsyncpa [#allocation5], 0
    %s13 = scalar_lea.sflag [#allocation5], 1
    %14 = vsyncpa %s13, 0
    loop: start=0, step=1, limit=4
    $region2: #{tpu_custom_call.1} parent=1 // loop_pre_header
      _
    $region3: #{tpu_custom_call.1} parent=1 // loop_header
      %s16 = sphi 0, %s20
      %p17 = scmp.ge.s32.totalorder %s16, 4
      %s23 = sphi 0, %s35
      %s24 = sphi 0, %s31
      %s25 = sphi 0, %s23
      %s26 = sphi 0, %s24
      %s27 = sphi 0, %s25
      %s28 = sphi 0, %s26
      %s40 = sphi 0, %s42
      %s43 = sphi 0, %s40
      %s44 = sphi 0, %s43
      %s60 = sphi 0, %s44
      %s66 = sphi 0, %s68
      %s69 = sphi 0, %s66
      %s70 = sphi 0, %s69
      %s86 = sphi 0, %s70
      %s94 = sphi 0, %s96
      %s97 = sphi 0, %s94
      %s98 = sphi 0, %s97
      %s114 = sphi 0, %s98
      %s122 = sphi 0, %s124
      %s125 = sphi 0, %s122
      %s126 = sphi 0, %s125
      %s142 = sphi 0, %s126
    $region4: #{tpu_custom_call.1} parent=1 // loop_header_branch
      %19 = sbr.rel (%p17) target = $region8
    $region5: #{tpu_custom_call.1} parent=1 // loop_body
      %s21 = ssub.s32 %s16, 1
      %s22 = ssub.s32 %s16, 2
      %s29 = sadd.s32 1, %s24
      %p30 = scmp.ge.s32.totalorder %s29, 1
      %s31 = scalar_select %p30, 0, %s29
      %s32 = sadd.s32 1, %s23
      %s33 = scalar_select %p30, %s32, %s23
      %p34 = scmp.ge.s32.totalorder %s33, 2
      %s35 = scalar_select %p34, 0, %s33
      %s36 = ssub.s32 %s23, %s35
      %s37 = ssub.s32 %s24, %s31
      %s38 = sor.u32 %s36, %s37
      %p39 = scmp.eq.s32.totalorder %s38, 0
      %s41 = sadd.s32 %s40, 1
      %s42 = scalar_select %p39, %s40, %s41
      %p45 = pneg %p39
      %p46 = scmp.eq.s32.totalorder %s16, 1
      %p47 = por %p45, %p46
      %p48 = scmp.ne.s32.totalorder %s40, %s43
      %p49 = scmp.eq.s32.totalorder %s16, 0
      %p50 = por %p48, %p49
      %p51 = scmp.ne.s32.totalorder %s40, %s43
      %p52 = scmp.eq.s32.totalorder %s21, 1
      %p53 = por %p51, %p52
      %p54 = scmp.ne.s32.totalorder %s43, %s44
      %p55 = scmp.eq.s32.totalorder %s21, 0
      %p56 = por %p54, %p55
      %p57 = scmp.ne.s32.totalorder %s43, %s44
      %p58 = scmp.eq.s32.totalorder %s22, 1
      %p59 = por %p57, %p58
      %p61 = scmp.ne.s32.totalorder %s44, %s60
      %p62 = scmp.eq.s32.totalorder %s22, 0
      %p63 = por %p61, %p62
      %s64 = ssub.s32 %s23, %s35
      %p65 = scmp.eq.s32.totalorder %s64, 0
      %s67 = sadd.s32 %s66, 1
      %s68 = scalar_select %p65, %s66, %s67
      %p71 = pneg %p65
      %p72 = scmp.eq.s32.totalorder %s16, 1
      %p73 = por %p71, %p72
      %p74 = scmp.ne.s32.totalorder %s66, %s69
      %p75 = scmp.eq.s32.totalorder %s16, 0
      %p76 = por %p74, %p75
      %p77 = scmp.ne.s32.totalorder %s66, %s69
      %p78 = scmp.eq.s32.totalorder %s21, 1
      %p79 = por %p77, %p78
      %p80 = scmp.ne.s32.totalorder %s69, %s70
      %p81 = scmp.eq.s32.totalorder %s21, 0
      %p82 = por %p80, %p81
      %p83 = scmp.ne.s32.totalorder %s69, %s70
      %p84 = scmp.eq.s32.totalorder %s22, 1
      %p85 = por %p83, %p84
      %p87 = scmp.ne.s32.totalorder %s70, %s86
      %p88 = scmp.eq.s32.totalorder %s22, 0
      %p89 = por %p87, %p88
      %s90 = sadd.s32 %s23, %s24
      %s91 = sadd.s32 %s35, %s31
      %s92 = ssub.s32 %s90, %s91
      %p93 = scmp.eq.s32.totalorder %s92, 0
      %s95 = sadd.s32 %s94, 1
      %s96 = scalar_select %p93, %s94, %s95
      %p99 = pneg %p93
      %p100 = scmp.eq.s32.totalorder %s16, 1
      %p101 = por %p99, %p100
      %p102 = scmp.ne.s32.totalorder %s94, %s97
      %p103 = scmp.eq.s32.totalorder %s16, 0
      %p104 = por %p102, %p103
      %p105 = scmp.ne.s32.totalorder %s94, %s97
      %p106 = scmp.eq.s32.totalorder %s21, 1
      %p107 = por %p105, %p106
      %p108 = scmp.ne.s32.totalorder %s97, %s98
      %p109 = scmp.eq.s32.totalorder %s21, 0
      %p110 = por %p108, %p109
      %p111 = scmp.ne.s32.totalorder %s97, %s98
      %p112 = scmp.eq.s32.totalorder %s22, 1
      %p113 = por %p111, %p112
      %p115 = scmp.ne.s32.totalorder %s98, %s114
      %p116 = scmp.eq.s32.totalorder %s22, 0
      %p117 = por %p115, %p116
      %s118 = sadd.s32 %s23, %s24
      %s119 = sadd.s32 %s35, %s31
      %s120 = ssub.s32 %s118, %s119
      %p121 = scmp.eq.s32.totalorder %s120, 0
      %s123 = sadd.s32 %s122, 1
      %s124 = scalar_select %p121, %s122, %s123
      %p127 = pneg %p121
      %p128 = scmp.eq.s32.totalorder %s16, 1
      %p129 = por %p127, %p128
      %p130 = scmp.ne.s32.totalorder %s122, %s125
      %p131 = scmp.eq.s32.totalorder %s16, 0
      %p132 = por %p130, %p131
      %p133 = scmp.ne.s32.totalorder %s122, %s125
      %p134 = scmp.eq.s32.totalorder %s21, 1
      %p135 = por %p133, %p134
      %p136 = scmp.ne.s32.totalorder %s125, %s126
      %p137 = scmp.eq.s32.totalorder %s21, 0
      %p138 = por %p136, %p137
      %p139 = scmp.ne.s32.totalorder %s125, %s126
      %p140 = scmp.eq.s32.totalorder %s22, 1
      %p141 = por %p139, %p140
      %p143 = scmp.ne.s32.totalorder %s126, %s142
      %p144 = scmp.eq.s32.totalorder %s22, 0
      %p145 = por %p143, %p144
      %p146 = scmp.le.s32.totalorder 1, %s16
      %p147 = scmp.lt.s32.totalorder %s16, 3
      %p148 = pnand %p146, %p147
      %p149 = pneg %p148
      // Predicated region
      $region9: #{tpu_custom_call.1} parent=5 // pred_check
        _
      $region10: #{tpu_custom_call.1} parent=5 // pred_check_branch
        %151 = sbr.rel (%p148) target = $region12
      $region11: #{tpu_custom_call.1} parent=5 // pred_region
        %s152 = ssub.s32 %s16, 1
      $region12: #{tpu_custom_call.1} parent=5 // pred_fallthru
        _
      %p153 = scmp.lt.s32.totalorder %s16, 2
      // Predicated region
      $region13: #{tpu_custom_call.1} parent=5 // pred_check
        %p154 = pneg %p153
      $region14: #{tpu_custom_call.1} parent=5 // pred_check_branch
        %156 = sbr.rel (%p154) target = $region16
      $region15: #{tpu_custom_call.1} parent=5 // pred_region
        // Predicated region
        $region17: #{tpu_custom_call.1} parent=15 // pred_check
          %p157 = pneg %p50
        $region18: #{tpu_custom_call.1} parent=15 // pred_check_branch
          %159 = sbr.rel (%p157) target = $region20
        $region19: #{tpu_custom_call.1} parent=15 // pred_region
          %s160 = sand.u32 %s40, 1
          %s161 = scalar_lea.sflag [#allocation3], %s160
          %s162 = sand.u32 %s40, 1
          %s163 = smul.addr %s162, 64
          %s164 = scalar_lea.vmem [#allocation2], %s163
          %s165 = smul.u32 4, %s24
          %167 = vsyncadd %s161, 0
          %s168 = smul.addr %s165, 2
          %s169 = smul.addr %s23, 8
          %s170 = sadd.s32 %s168, %s169
          %s171 = smul.addr %s170, 8
          %s172 = scalar_lea.hbm %s0, %s171
          %s173 = sshll.u32 %s172, 4
          %s174 = int_to_ptr.hbm [resolvable:$true] %s173
          %s175 = sshll.u32 %s164, 4
          %s176 = int_to_ptr.vmem [resolvable:$true] %s175
          %181 = dma.hbm_to_vmem [thread:$0]  %s174, 1024, %s176, %s161, 128, 128, 8
        $region20: #{tpu_custom_call.1} parent=15 // pred_fallthru
          _
        // Predicated region
        $region21: #{tpu_custom_call.1} parent=15 // pred_check
          %p182 = pneg %p76
        $region22: #{tpu_custom_call.1} parent=15 // pred_check_branch
          %184 = sbr.rel (%p182) target = $region24
        $region23: #{tpu_custom_call.1} parent=15 // pred_region
          %s185 = sand.u32 %s66, 1
          %s186 = scalar_lea.sflag [#allocation5], %s185
          %s187 = sand.u32 %s66, 1
          %s188 = smul.addr %s187, 16
          %s189 = scalar_lea.vmem [#allocation4], %s188
          %191 = vsyncadd %s186, 0
          %s192 = smul.addr %s23, 2
          %s193 = smul.addr %s192, 8
          %s194 = scalar_lea.hbm %s1, %s193
          %s195 = sshll.u32 %s194, 4
          %s196 = int_to_ptr.hbm [resolvable:$true] %s195
          %s197 = sshll.u32 %s189, 4
          %s198 = int_to_ptr.vmem [resolvable:$true] %s197
          %203 = dma.hbm_to_vmem [thread:$0]  %s196, 256, %s198, %s186, 128, 128, 8
        $region24: #{tpu_custom_call.1} parent=15 // pred_fallthru
          _
      $region16: #{tpu_custom_call.1} parent=5 // pred_fallthru
        _
      %p204 = scmp.le.s32.totalorder 1, %s16
      %p205 = scmp.lt.s32.totalorder %s16, 3
      %p206 = pnand %p204, %p205
      %p207 = pneg %p206
      // Predicated region
      $region25: #{tpu_custom_call.1} parent=5 // pred_check
        _
      $region26: #{tpu_custom_call.1} parent=5 // pred_check_branch
        %209 = sbr.rel (%p206) target = $region28
      $region27: #{tpu_custom_call.1} parent=5 // pred_region
        %s210 = ssub.s32 %s16, 1
        %s211 = sand.u32 %s43, 1
        %s212 = scalar_lea.sflag [#allocation3], %s211
        %s213 = sand.u32 %s43, 1
        %s214 = smul.addr %s213, 64
        %s215 = scalar_lea.vmem [#allocation2], %s214
        // Predicated region
        $region29: #{tpu_custom_call.1} parent=27 // pred_check
          %p216 = pneg %p56
        $region30: #{tpu_custom_call.1} parent=27 // pred_check_branch
          %218 = sbr.rel (%p216) target = $region32
        $region31: #{tpu_custom_call.1} parent=27 // pred_region
          %220 = dma.done %s212, 1024
        $region32: #{tpu_custom_call.1} parent=27 // pred_fallthru
          _
        %s221 = sand.u32 %s69, 1
        %s222 = scalar_lea.sflag [#allocation5], %s221
        %s223 = sand.u32 %s69, 1
        %s224 = smul.addr %s223, 16
        %s225 = scalar_lea.vmem [#allocation4], %s224
        // Predicated region
        $region33: #{tpu_custom_call.1} parent=27 // pred_check
          %p226 = pneg %p82
        $region34: #{tpu_custom_call.1} parent=27 // pred_check_branch
          %228 = sbr.rel (%p226) target = $region36
        $region35: #{tpu_custom_call.1} parent=27 // pred_region
          %230 = dma.done %s222, 256
        $region36: #{tpu_custom_call.1} parent=27 // pred_fallthru
          _
        %s231 = sand.u32 %s43, 1
        %s232 = scalar_lea.sflag [#allocation3], %s231
        %s233 = sand.u32 %s43, 1
        %s234 = smul.addr %s233, 64
        %s235 = scalar_lea.vmem [#allocation2], %s234
        %p236 = pneg %p56
        %p237 = pneg %p53
        %s238 = sand.u32 %s69, 1
        %s239 = scalar_lea.sflag [#allocation5], %s238
        %s240 = sand.u32 %s69, 1
        %s241 = smul.addr %s240, 16
        %s242 = scalar_lea.vmem [#allocation4], %s241
        %p243 = pneg %p82
        %p244 = pneg %p79
        %p245 = pneg %p110
        %p246 = pneg %p107
        %s247 = sadd.s32 %s25, %s26
        %p248 = scmp.lt.s32.totalorder %s247, 1
        %s249 = scalar_select %p248, %s247, 1
        %s250 = scalar_lea.vmem %s2, %s249
        %p251 = pneg %p138
        %p252 = pneg %p135
        %s253 = sadd.s32 %s25, %s26
        %p254 = scmp.lt.s32.totalorder %s253, 1
        %s255 = scalar_select %p254, %s253, 1
        %s256 = scalar_lea.vmem %s3, %s255
        %s257 = smul.u32 4, %s26
        %s258 = sadd.s32 %s25, %s26
        %p259 = scmp.lt.s32.totalorder %s258, 1
        %s260 = scalar_select %p259, %s258, 1
        %s261 = scalar_lea.vmem %s2, %s260
        %s262 = sadd.s32 %s25, %s26
        %s263 = sadd.s32 %s25, %s26
        %p264 = scmp.lt.s32.totalorder %s263, 1
        %s265 = scalar_select %p264, %s263, 1
        %s266 = scalar_lea.vmem %s3, %s265
        %s267 = sadd.s32 %s25, %s26
        %v268 = vld [vmem:[%s215] sm:$0xff]
        %v269 = vld [vmem:[%s215 + $0x8] sm:$0xff]
        %v270 = vld [vmem:[%s215 + $0x10] sm:$0xff]
        %v271 = vld [vmem:[%s215 + $0x18] sm:$0xff]
        %v272 = vld [vmem:[%s215 + $0x20] sm:$0xff]
        %v273 = vld [vmem:[%s215 + $0x28] sm:$0xff]
        %v274 = vld [vmem:[%s215 + $0x30] sm:$0xff]
        %v275 = vld [vmem:[%s215 + $0x38] sm:$0xff]
        %v276 = vld [vmem:[%s225] sm:$0xff]
        %v277 = vld [vmem:[%s225 + $0x8] sm:$0xff]
        %vm286 = vcmask 1040384
        %v287 = vrot.slane %v268, 7
        %v288 = vrot.slane %v269, 7
        %v289 = vsel %vm286, %v287, %v288
        %v290 = vrot.slane %v270, 7
        %v291 = vrot.slane %v271, 7
        %v292 = vsel %vm286, %v290, %v291
        %v293 = vrot.slane %v272, 7
        %v294 = vrot.slane %v273, 7
        %v295 = vsel %vm286, %v293, %v294
        %v296 = vrot.slane %v274, 7
        %v297 = vrot.slane %v275, 7
        %v298 = vsel %vm286, %v296, %v297
        %v307 = vsub.f32 %v268, %v287
        %v308 = vsub.f32 %v269, %v289
        %v309 = vsub.f32 %v270, %v290
        %v310 = vsub.f32 %v271, %v292
        %v311 = vsub.f32 %v272, %v293
        %v312 = vsub.f32 %v273, %v295
        %v313 = vsub.f32 %v274, %v296
        %v314 = vsub.f32 %v275, %v298
        %v315 = vand.u32 2147483647, %v307
        %v316 = vand.u32 2147483647, %v308
        %v317 = vand.u32 2147483647, %v309
        %v318 = vand.u32 2147483647, %v310
        %v319 = vand.u32 2147483647, %v311
        %v320 = vand.u32 2147483647, %v312
        %v321 = vand.u32 2147483647, %v313
        %v322 = vand.u32 2147483647, %v314
        %v325 = vrot.slane %v276, 7
        %v326 = vrot.slane %v277, 7
        %v327 = vsel %vm286, %v325, %v326
        %v330 = vmul.f32 %v315, %v325
        %v331 = vmul.f32 %v316, %v327
        %v332 = vmul.f32 %v317, %v325
        %v333 = vmul.f32 %v318, %v327
        %v334 = vmul.f32 %v319, %v325
        %v335 = vmul.f32 %v320, %v327
        %v336 = vmul.f32 %v321, %v325
        %v337 = vmul.f32 %v322, %v327
        %338 = vrot.lane.b32.xlu0 %v268, 1
        %v339 = vpop.permute.xlu0 %338
        %340 = vrot.lane.b32.xlu0 %v269, 1
        %v341 = vpop.permute.xlu0 %340
        %342 = vrot.lane.b32.xlu0 %v270, 1
        %v343 = vpop.permute.xlu0 %342
        %344 = vrot.lane.b32.xlu0 %v271, 1
        %v345 = vpop.permute.xlu0 %344
        %346 = vrot.lane.b32.xlu0 %v272, 1
        %v347 = vpop.permute.xlu0 %346
        %348 = vrot.lane.b32.xlu0 %v273, 1
        %v349 = vpop.permute.xlu0 %348
        %350 = vrot.lane.b32.xlu0 %v274, 1
        %v351 = vpop.permute.xlu0 %350
        %352 = vrot.lane.b32.xlu0 %v275, 1
        %v353 = vpop.permute.xlu0 %352
        %v362 = vsub.f32 %v268, %v339
        %v363 = vsub.f32 %v269, %v341
        %v364 = vsub.f32 %v270, %v343
        %v365 = vsub.f32 %v271, %v345
        %v366 = vsub.f32 %v272, %v347
        %v367 = vsub.f32 %v273, %v349
        %v368 = vsub.f32 %v274, %v351
        %v369 = vsub.f32 %v275, %v353
        %v370 = vand.u32 2147483647, %v362
        %v371 = vand.u32 2147483647, %v363
        %v372 = vand.u32 2147483647, %v364
        %v373 = vand.u32 2147483647, %v365
        %v374 = vand.u32 2147483647, %v366
        %v375 = vand.u32 2147483647, %v367
        %v376 = vand.u32 2147483647, %v368
        %v377 = vand.u32 2147483647, %v369
        %378 = vrot.lane.b32.xlu0 %v276, 1
        %v379 = vpop.permute.xlu0 %378
        %380 = vrot.lane.b32.xlu0 %v277, 1
        %v381 = vpop.permute.xlu0 %380
        %v384 = vmul.f32 %v370, %v379
        %v385 = vmul.f32 %v371, %v381
        %v386 = vmul.f32 %v372, %v379
        %v387 = vmul.f32 %v373, %v381
        %v388 = vmul.f32 %v374, %v379
        %v389 = vmul.f32 %v375, %v381
        %v390 = vmul.f32 %v376, %v379
        %v391 = vmul.f32 %v377, %v381
        %vm400 = vcmask 1046528
        %v401 = vrot.slane %v330, 1
        %v402 = vrot.slane %v331, 1
        %v403 = vsel %vm400, %v401, %v402
        %v404 = vrot.slane %v332, 1
        %v405 = vrot.slane %v333, 1
        %v406 = vsel %vm400, %v404, %v405
        %v407 = vrot.slane %v334, 1
        %v408 = vrot.slane %v335, 1
        %v409 = vsel %vm400, %v407, %v408
        %v410 = vrot.slane %v336, 1
        %v411 = vrot.slane %v337, 1
        %v412 = vsel %vm400, %v410, %v411
        %vm421 = vcmask 130048
        %v422 = vsel %vm421, %v403, 0.0
        %vm423 = vcmask 129024
        %v424 = vsel %vm423, %v402, 0.0
        %v425 = vadd.f32 %v422, %v424
        %v426 = vsel %vm421, %v406, 0.0
        %v427 = vadd.f32 %v425, %v426
        %v428 = vsel %vm423, %v405, 0.0
        %v429 = vadd.f32 %v427, %v428
        %v430 = vsel %vm421, %v409, 0.0
        %v431 = vadd.f32 %v429, %v430
        %v432 = vsel %vm423, %v408, 0.0
        %v433 = vadd.f32 %v431, %v432
        %v434 = vsel %vm421, %v412, 0.0
        %v435 = vadd.f32 %v433, %v434
        %v436 = vsel %vm423, %v411, 0.0
        %v437 = vadd.f32 %v435, %v436
        %438 = vadd.xlane.f32.xlu0 %v437
        %v439 = vpop.xlane.xlu0 %438
        %v440 = vrot.slane %v439, 4
        %v441 = vadd.f32 %v439, %v440
        %v442 = vrot.slane %v441, 2
        %v443 = vadd.f32 %v441, %v442
        %v444 = vrot.slane %v443, 1
        %v445 = vadd.f32 %v443, %v444
        %s446 = vtos %v445
        %v447 = vstv %s446
        %vm448 = vcmask 0
        %449 = vst.msk [vmem:[%s261] sm:$0x1] %vm448, %v447
        %458 = vrot.lane.b32.xlu0 %v384, 127
        %v459 = vpop.permute.xlu0 %458
        %460 = vrot.lane.b32.xlu0 %v385, 127
        %v461 = vpop.permute.xlu0 %460
        %462 = vrot.lane.b32.xlu0 %v386, 127
        %v463 = vpop.permute.xlu0 %462
        %464 = vrot.lane.b32.xlu0 %v387, 127
        %v465 = vpop.permute.xlu0 %464
        %466 = vrot.lane.b32.xlu0 %v388, 127
        %v467 = vpop.permute.xlu0 %466
        %468 = vrot.lane.b32.xlu0 %v389, 127
        %v469 = vpop.permute.xlu0 %468
        %470 = vrot.lane.b32.xlu0 %v390, 127
        %v471 = vpop.permute.xlu0 %470
        %472 = vrot.lane.b32.xlu0 %v391, 127
        %v473 = vpop.permute.xlu0 %472
        %vm482 = vcmask 121856
        %v483 = vsel %vm482, %v459, 0.0
        %v484 = vsel %vm482, %v461, 0.0
        %v485 = vadd.f32 %v483, %v484
        %v486 = vsel %vm482, %v463, 0.0
        %v487 = vadd.f32 %v485, %v486
        %v488 = vsel %vm482, %v465, 0.0
        %v489 = vadd.f32 %v487, %v488
        %v490 = vsel %vm482, %v467, 0.0
        %v491 = vadd.f32 %v489, %v490
        %v492 = vsel %vm482, %v469, 0.0
        %v493 = vadd.f32 %v491, %v492
        %v494 = vsel %vm482, %v471, 0.0
        %v495 = vadd.f32 %v493, %v494
        %v496 = vsel %vm482, %v473, 0.0
        %v497 = vadd.f32 %v495, %v496
        %498 = vadd.xlane.f32.xlu0 %v497
        %v499 = vpop.xlane.xlu0 %498
        %v500 = vrot.slane %v499, 4
        %v501 = vadd.f32 %v499, %v500
        %v502 = vrot.slane %v501, 2
        %v503 = vadd.f32 %v501, %v502
        %v504 = vrot.slane %v503, 1
        %v505 = vadd.f32 %v503, %v504
        %s506 = vtos %v505
        %v507 = vstv %s506
        %508 = vst.msk [vmem:[%s266] sm:$0x1] %vm448, %v507
        %s509 = sadd.s32 %s25, %s26
        %p510 = scmp.lt.s32.totalorder %s509, 1
        %s511 = scalar_select %p510, %s509, 1
        %s512 = scalar_lea.vmem %s2, %s511
        %s513 = sadd.s32 %s25, %s26
        %p514 = scmp.lt.s32.totalorder %s513, 1
        %s515 = scalar_select %p514, %s513, 1
        %s516 = scalar_lea.vmem %s3, %s515
        // Predicated region
        $region37: #{tpu_custom_call.1} parent=27 // pred_check
          %p517 = pneg %p107
        $region38: #{tpu_custom_call.1} parent=27 // pred_check_branch
          %519 = sbr.rel (%p517) target = $region40
        $region39: #{tpu_custom_call.1} parent=27 // pred_region
          %s520 = sadd.s32 %s25, %s26
        $region40: #{tpu_custom_call.1} parent=27 // pred_fallthru
          _
        // Predicated region
        $region41: #{tpu_custom_call.1} parent=27 // pred_check
          %p521 = pneg %p135
        $region42: #{tpu_custom_call.1} parent=27 // pred_check_branch
          %523 = sbr.rel (%p521) target = $region44
        $region43: #{tpu_custom_call.1} parent=27 // pred_region
          %s524 = sadd.s32 %s25, %s26
        $region44: #{tpu_custom_call.1} parent=27 // pred_fallthru
          _
      $region28: #{tpu_custom_call.1} parent=5 // pred_fallthru
        _
      %p525 = scmp.le.s32.totalorder 2, %s16
      // Predicated region
      $region45: #{tpu_custom_call.1} parent=5 // pred_check
        %p526 = pneg %p525
      $region46: #{tpu_custom_call.1} parent=5 // pred_check_branch
        %528 = sbr.rel (%p526) target = $region48
      $region47: #{tpu_custom_call.1} parent=5 // pred_region
        %s529 = ssub.s32 %s16, 2
        // Predicated region
        $region49: #{tpu_custom_call.1} parent=47 // pred_check
          %p530 = pneg %p113
        $region50: #{tpu_custom_call.1} parent=47 // pred_check_branch
          %532 = sbr.rel (%p530) target = $region52
        $region51: #{tpu_custom_call.1} parent=47 // pred_region
          %s533 = sadd.s32 %s27, %s28
          %p534 = scmp.lt.s32.totalorder %s533, 1
          %s535 = scalar_select %p534, %s533, 1
          %s536 = scalar_lea.vmem %s2, %s535
        $region52: #{tpu_custom_call.1} parent=47 // pred_fallthru
          _
        // Predicated region
        $region53: #{tpu_custom_call.1} parent=47 // pred_check
          %p537 = pneg %p141
        $region54: #{tpu_custom_call.1} parent=47 // pred_check_branch
          %539 = sbr.rel (%p537) target = $region56
        $region55: #{tpu_custom_call.1} parent=47 // pred_region
          %s540 = sadd.s32 %s27, %s28
          %p541 = scmp.lt.s32.totalorder %s540, 1
          %s542 = scalar_select %p541, %s540, 1
          %s543 = scalar_lea.vmem %s3, %s542
        $region56: #{tpu_custom_call.1} parent=47 // pred_fallthru
          _
      $region48: #{tpu_custom_call.1} parent=5 // pred_fallthru
        _
    $region6: #{tpu_custom_call.1} parent=1 // loop_footer
      %s20 = sadd.s32 1, %s16
    $region7: #{tpu_custom_call.1} parent=1 // loop_footer_branch
      %15 = sbr.rel target = $region3
    $region8: #{tpu_custom_call.1} parent=1 // loop_exit
      _
    %544 = vsyncpa [#allocation3], 1
    %s545 = scalar_lea.sflag [#allocation3], 1
    %546 = vsyncpa %s545, 1
    %547 = vsyncpa [#allocation5], 1
    %s548 = scalar_lea.sflag [#allocation5], 1
    %549 = vsyncpa %s548, 1

</llo_original>
